<compile_context>
chip_gen: v5e
topology: v5e:2x2
jax: 0.10.0
libtpu: 0.0.40
codegen_flags: <defaults>
</compile_context>

<pallas_src>
import functools

import numpy as np
import jax
import jax.numpy as jnp
from jax.experimental import pallas as pl
from jax.experimental.pallas import tpu as pltpu


def _round_up(x, m):
    return ((x + m - 1) // m) * m


def _make_phase_tables(L, D):
    """Compile-time tables: (D, out_D) lane-scale matrix and (1, out_D) offsets.

    Output lane j of a row is sin(sum_k x[k] * S[k, j] + off[j]) except the
    first D (identity) lanes, which the kernel passes through directly:
      * identity lanes j < D:           S[j, j] = 1,   off = 0
      * sin slot (freq i, feature d):   S[d, .] = 2^i, off = 0
      * cos slot (freq i, feature d):   S[d, .] = 2^i, off = pi/2
    """
    out_D = D * (1 + 2 * L)
    S = np.zeros((D, out_D), dtype=np.float32)
    off = np.zeros((1, out_D), dtype=np.float32)
    for d in range(D):
        S[d, d] = 1.0
    for i in range(L):
        for d in range(D):
            S[d, D * (1 + 2 * i) + d] = 2.0 ** i          # sin(2^i x_d)
            S[d, D * (2 + 2 * i) + d] = 2.0 ** i          # cos(2^i x_d)
            off[0, D * (2 + 2 * i) + d] = np.pi / 2.0     # cos(y) = sin(y + pi/2)
    return S, off


def _pos_enc_kernel(x_ref, scale_ref, offset_ref, o_ref, *, D, out_D):
    # x_ref:      (tm, D)       input rows
    # scale_ref:  (D, out_D)    lane-scale matrix (constants, VMEM-resident)
    # offset_ref: (1, out_D)    lane phase offsets (0 or pi/2)
    # o_ref:      (tm, out_D)   output tile
    x = x_ref[...].astype(jnp.float32)      # f32 transcendentals on every chip
    S = scale_ref[...]

    # Lane-dense phase construction (one wide array, not 2L narrow slices).
    # Power-of-two scales + exact-zero cross terms keep this bit-exact to
    # 2^i * x for the encoded lanes and to x for the identity lanes.
    ph = x[:, 0:1] * S[0:1, :]
    for k in range(1, D):
        ph = ph + x[:, k:k + 1] * S[k:k + 1, :]
    ph = ph + offset_ref[...]

    enc = jnp.sin(ph)                       # single wide transcendental pass

    # Identity lanes (j < D) carry x itself (scale 1, offset 0 in the tables).
    lane = jax.lax.broadcasted_iota(jnp.int32, (1, out_D), 1)
    out = jnp.where(lane < D, ph, enc)
    o_ref[...] = out.astype(o_ref.dtype)    # one aligned full-tile store


def _choose_row_tile(rows, D, out_D, itemsize,
                     vmem_budget_bytes=20 * 1024 * 1024,
                     max_tile=32768, target_steps=8, min_tile_for_split=8192):
    """Row tile: as large as the double-buffered in+out VMEM budget allows,
    but small enough that large inputs still get >= target_steps grid steps
    (pipelining + v7x two-TensorCore 'parallel' split)."""
    rows8 = _round_up(rows, 8)
    per_row = 2 * (D + out_D) * itemsize            # 2 buffers each for in and out
    budget_tile = max(8, (vmem_budget_bytes // max(per_row, 1)) // 8 * 8)
    tile = min(budget_tile, max_tile, rows8)
    steps_tile = _round_up(pl.cdiv(rows8, target_steps), 8)
    tile = min(tile, max(steps_tile, min(min_tile_for_split, rows8)))
    if tile >= rows:
        return rows            # single full-extent block (no %8 requirement)
    return max(8, tile)        # %8 tile; Pallas masks the partial final block


def positional_encoding(x, L):
    """Pallas implementation of Positional_Encoding(L).forward(x)."""
    orig_shape = x.shape
    D = int(orig_shape[-1])
    rows = 1
    for s in orig_shape[:-1]:
        rows *= int(s)
    out_D = D * (1 + 2 * L)
    itemsize = jnp.dtype(x.dtype).itemsize

    x2d = x.reshape(rows, D)
    scale_tab, offset_tab = _make_phase_tables(L, D)

    row_tile = _choose_row_tile(rows, D, out_D, itemsize)
    grid = (pl.cdiv(rows, row_tile),)     # partial final block handled by Pallas

    kernel = functools.partial(_pos_enc_kernel, D=D, out_D=out_D)

    cost = pl.CostEstimate(
        flops=rows * out_D * (2 * D + 2),
        transcendentals=rows * out_D,
        bytes_accessed=rows * (D + out_D) * itemsize,
    )

    out2d = pl.pallas_call(
        kernel,
        out_shape=jax.ShapeDtypeStruct((rows, out_D), x.dtype),
        grid_spec=pltpu.PrefetchScalarGridSpec(
            num_scalar_prefetch=0,
            grid=grid,
            in_specs=[
                pl.BlockSpec((row_tile, D), lambda i: (i, 0)),
                pl.BlockSpec((D, out_D), lambda i: (0, 0)),   # tiny constant table
                pl.BlockSpec((1, out_D), lambda i: (0, 0)),   # tiny constant table
            ],
            out_specs=pl.BlockSpec((row_tile, out_D), lambda i: (i, 0)),
        ),
        compiler_params=pltpu.CompilerParams(
            dimension_semantics=("parallel",),     # rows independent; v7x 2-TC split
            vmem_limit_bytes=32 * 1024 * 1024,     # raise v5e scoped default, fits v7x
        ),
        cost_estimate=cost,
    )(x2d, jnp.asarray(scale_tab), jnp.asarray(offset_tab))

    return out2d.reshape(*orig_shape[:-1], out_D)


def positional_encoding_ref(x, L):
    """Pure-JAX reference matching the PyTorch module exactly."""
    rets = [x]
    for i in range(L):
        rets.append(jnp.sin(2.0 ** i * x))
        rets.append(jnp.cos(2.0 ** i * x))
    return jnp.concatenate(rets, axis=-1)


if __name__ == "__main__":
    # Case 1: small deterministic example (batch=2, seq=8, features=4, L=4).
    L1 = 4
    x1 = jax.random.normal(jax.random.PRNGKey(0), (2, 8, 4), dtype=jnp.float32)
    out1 = jax.block_until_ready(positional_encoding(x1, L1))
    ref1 = positional_encoding_ref(x1, L1)
    assert out1.shape == (2, 8, 4 * (1 + 2 * L1)), out1.shape
    assert jnp.allclose(out1, ref1, atol=1e-5, rtol=1e-5), "mismatch vs reference (case 1)"

    # Case 2: NeRF-like config (D=3, L=10 -> out_D=63), non-multiple-of-8 row
    # count (exercises the masked partial final block), coords in [-1, 1].
    L2 = 10
    x2 = jax.random.uniform(jax.random.PRNGKey(0), (3, 50, 3),
                            dtype=jnp.float32, minval=-1.0, maxval=1.0)
    out2 = jax.block_until_ready(positional_encoding(x2, L2))
    ref2 = positional_encoding_ref(x2, L2)
    assert out2.shape == (3, 50, 3 * (1 + 2 * L2)), out2.shape
    assert jnp.allclose(out2, ref2, atol=2e-4, rtol=1e-5), "mismatch vs reference (case 2)"

    print("KERNEL_OK")
</pallas_src>

<mosaic_0001>
module attributes {stable_mosaic.version = 11 : i64} {
  func.func @_pos_enc_kernel(%arg0: i32, %arg1: memref<16x4xf32, #tpu.memory_space<vmem>>, %arg2: memref<4x36xf32, #tpu.memory_space<vmem>>, %arg3: memref<1x36xf32, #tpu.memory_space<vmem>>, %arg4: memref<16x36xf32, #tpu.memory_space<vmem>>) attributes {dimension_semantics = [#tpu.dimension_semantics<parallel>], iteration_bounds = array<i64: 1>, scalar_prefetch = 0 : i64, scratch_operands = 0 : i64, tpu.core_type = #tpu.core_type<tc>, window_params = [{transform_indices = @transform_0, window_bounds = array<i64: 16, 4>}, {pipeline_mode = #tpu.pipeline_mode<synchronous>, transform_indices = @transform_1, window_bounds = array<i64: 4, 36>}, {pipeline_mode = #tpu.pipeline_mode<synchronous>, transform_indices = @transform_2, window_bounds = array<i64: 1, 36>}, {transform_indices = @transform_3, window_bounds = array<i64: 16, 36>}]} {
    %c0 = arith.constant 0 : index
    %c0_0 = arith.constant 0 : index
    %0 = vector.load %arg1[%c0, %c0_0] : memref<16x4xf32, #tpu.memory_space<vmem>>, vector<16x4xf32>
    %c0_1 = arith.constant 0 : index
    %c0_2 = arith.constant 0 : index
    %1 = vector.load %arg2[%c0_1, %c0_2] : memref<4x36xf32, #tpu.memory_space<vmem>>, vector<4x36xf32>
    %2 = vector.extract_strided_slice %0 {offsets = [0, 0], sizes = [16, 1], strides = [1, 1]} : vector<16x4xf32> to vector<16x1xf32>
    %3 = vector.extract_strided_slice %1 {offsets = [0, 0], sizes = [1, 36], strides = [1, 1]} : vector<4x36xf32> to vector<1x36xf32>
    %4 = vector.broadcast %2 : vector<16x1xf32> to vector<16x36xf32>
    %5 = vector.broadcast %3 : vector<1x36xf32> to vector<16x36xf32>
    %6 = arith.mulf %4, %5 : vector<16x36xf32>
    %7 = vector.extract_strided_slice %0 {offsets = [0, 1], sizes = [16, 1], strides = [1, 1]} : vector<16x4xf32> to vector<16x1xf32>
    %8 = vector.extract_strided_slice %1 {offsets = [1, 0], sizes = [1, 36], strides = [1, 1]} : vector<4x36xf32> to vector<1x36xf32>
    %9 = vector.broadcast %7 : vector<16x1xf32> to vector<16x36xf32>
    %10 = vector.broadcast %8 : vector<1x36xf32> to vector<16x36xf32>
    %11 = arith.mulf %9, %10 : vector<16x36xf32>
    %12 = arith.addf %6, %11 : vector<16x36xf32>
    %13 = vector.extract_strided_slice %0 {offsets = [0, 2], sizes = [16, 1], strides = [1, 1]} : vector<16x4xf32> to vector<16x1xf32>
    %14 = vector.extract_strided_slice %1 {offsets = [2, 0], sizes = [1, 36], strides = [1, 1]} : vector<4x36xf32> to vector<1x36xf32>
    %15 = vector.broadcast %13 : vector<16x1xf32> to vector<16x36xf32>
    %16 = vector.broadcast %14 : vector<1x36xf32> to vector<16x36xf32>
    %17 = arith.mulf %15, %16 : vector<16x36xf32>
    %18 = arith.addf %12, %17 : vector<16x36xf32>
    %19 = vector.extract_strided_slice %0 {offsets = [0, 3], sizes = [16, 1], strides = [1, 1]} : vector<16x4xf32> to vector<16x1xf32>
    %20 = vector.extract_strided_slice %1 {offsets = [3, 0], sizes = [1, 36], strides = [1, 1]} : vector<4x36xf32> to vector<1x36xf32>
    %21 = vector.broadcast %19 : vector<16x1xf32> to vector<16x36xf32>
    %22 = vector.broadcast %20 : vector<1x36xf32> to vector<16x36xf32>
    %23 = arith.mulf %21, %22 : vector<16x36xf32>
    %24 = arith.addf %18, %23 : vector<16x36xf32>
    %c0_3 = arith.constant 0 : index
    %c0_4 = arith.constant 0 : index
    %25 = vector.load %arg3[%c0_3, %c0_4] : memref<1x36xf32, #tpu.memory_space<vmem>>, vector<1x36xf32>
    %26 = vector.broadcast %25 : vector<1x36xf32> to vector<16x36xf32>
    %27 = arith.addf %24, %26 : vector<16x36xf32>
    %28 = math.sin %27 : vector<16x36xf32>
    %29 = tpu.iota {dimensions = array<i32: 1>} : vector<1x36xi32>
    %c4_i32 = arith.constant 4 : i32
    %30 = vector.broadcast %c4_i32 : i32 to vector<1x36xi32>
    %31 = arith.cmpi slt, %29, %30 : vector<1x36xi32>
    %32 = vector.shape_cast %31 : vector<1x36xi1> to vector<1x36xi1>
    %33 = vector.broadcast %32 : vector<1x36xi1> to vector<16x36xi1>
    %34 = arith.select %33, %27, %28 : vector<16x36xi1>, vector<16x36xf32>
    %c0_5 = arith.constant 0 : index
    %c0_6 = arith.constant 0 : index
    %35 = vector.load %arg4[%c0_5, %c0_6] : memref<16x36xf32, #tpu.memory_space<vmem>>, vector<16x36xf32>
    tpu.vector_store %arg4[%c0_5, %c0_6], %34 {strides = array<i32>} : memref<16x36xf32, #tpu.memory_space<vmem>>, vector<16x36xf32>,
    return
  }
  func.func @transform_0(%arg0: i32) -> (i32, i32) {
    %c0_i32 = arith.constant 0 : i32
    %c0_i32_0 = arith.constant 0 : i32
    return %arg0, %c0_i32 : i32, i32
  }
  func.func @transform_1(%arg0: i32) -> (i32, i32) {
    %c0_i32 = arith.constant 0 : i32
    %c0_i32_0 = arith.constant 0 : i32
    %c0_i32_1 = arith.constant 0 : i32
    return %c0_i32, %c0_i32_0 : i32, i32
  }
  func.func @transform_2(%arg0: i32) -> (i32, i32) {
    %c0_i32 = arith.constant 0 : i32
    %c0_i32_0 = arith.constant 0 : i32
    %c0_i32_1 = arith.constant 0 : i32
    return %c0_i32, %c0_i32_0 : i32, i32
  }
  func.func @transform_3(%arg0: i32) -> (i32, i32) {
    %c0_i32 = arith.constant 0 : i32
    %c0_i32_0 = arith.constant 0 : i32
    return %arg0, %c0_i32 : i32, i32
  }
}

</mosaic_0001>

<llo_original>
// kernel: tpu_custom_call.1
$region0: #{tpu_custom_call.1}
  #allocation0 [shape = 'u32[]', space=smem, size = 0x4, offset = 0x4, fixed_abs, tag = 'smem constant byte address 0x4 - core index']
  #allocation1 [shape = 'u32[72,128]{1,0:T(1,128)}', space=vmem, size = 0x9000, scoped, tag = 'internal scratch']
  %s0 = inlined_call_operand.vmem [shape: f32[16,4], index: 0, kind: input, shape index: {}]
  %s1 = inlined_call_operand.vmem [shape: f32[4,36], index: 1, kind: input, shape index: {}]
  %s2 = inlined_call_operand.vmem [shape: f32[1,36], index: 2, kind: input, shape index: {}]
  %s3 = inlined_call_operand.hbm [shape: f32[16,36], index: 3, kind: output, shape index: {}]
  %s4 = sld [smem:[#allocation0]]
  $region22: #{tpu_custom_call.1} parent=0
    _
  %s6 = ssub.s32 1, %s4
  %s7 = scalar_select 0, %s6, %s4
  $region1: #{tpu_custom_call.1} parent=0
    #allocation2 [shape = 'u8[8192]{0}', space=vmem, size = 0x2000, scoped, tag = 'output window, operand 0, single buffered']
    #allocation3 [shape = 's32[1]{0}', space=sflag, size = 0x4, scoped, tag = 'scoped memory for tpu_custom_call.1']
    %8 = vsyncpa [#allocation3], 0
    // Predicated region
    $region2: #{tpu_custom_call.1} parent=1 // pred_check
      _
    $region3: #{tpu_custom_call.1} parent=1 // pred_check_branch
      %10 = sbr.rel (0) target = $region5
    $region4: #{tpu_custom_call.1} parent=1 // pred_region
      _
    $region5: #{tpu_custom_call.1} parent=1 // pred_fallthru
      _
    // Predicated region
    $region6: #{tpu_custom_call.1} parent=1 // pred_check
      _
    $region7: #{tpu_custom_call.1} parent=1 // pred_check_branch
      %12 = sbr.rel (0) target = $region9
    $region8: #{tpu_custom_call.1} parent=1 // pred_region
      _
    $region9: #{tpu_custom_call.1} parent=1 // pred_fallthru
      _
    // Predicated region
    $region10: #{tpu_custom_call.1} parent=1 // pred_check
      _
    $region11: #{tpu_custom_call.1} parent=1 // pred_check_branch
      %14 = sbr.rel (0) target = $region13
    $region12: #{tpu_custom_call.1} parent=1 // pred_region
      _
    $region13: #{tpu_custom_call.1} parent=1 // pred_fallthru
      _
    %v15 = vld [vmem:[%s0] sm:$0xff]
    %v16 = vld [vmem:[%s0 + $0x8] sm:$0xff]
    %v17 = vld [vmem:[%s1] sm:$0xf]
    %19 = vset.pattern.permute.xlu0 0
    %20 = vperm.xlu0 %19, %v15
    %v21 = vpop.permute.xlu0 %20
    %24 = vset.pattern.permute.xlu0 0
    %25 = vperm.xlu0 %24, %v16
    %v26 = vpop.permute.xlu0 %25
    %v28 = vperm.slane %v17, 0
    %v29 = vmul.f32 %v21, %v28
    %v30 = vmul.f32 %v26, %v28
    %31 = vset.pattern.permute.xlu0 1
    %32 = vperm.xlu0 %31, %v15
    %v33 = vpop.permute.xlu0 %32
    %35 = vset.pattern.permute.xlu0 1
    %36 = vperm.xlu0 %35, %v16
    %v37 = vpop.permute.xlu0 %36
    %v39 = vperm.slane %v17, 1
    %v40 = vmul.f32 %v33, %v39
    %v41 = vmul.f32 %v37, %v39
    %v42 = vadd.f32 %v29, %v40
    %v43 = vadd.f32 %v30, %v41
    %44 = vset.pattern.permute.xlu0 2
    %45 = vperm.xlu0 %44, %v15
    %v46 = vpop.permute.xlu0 %45
    %48 = vset.pattern.permute.xlu0 2
    %49 = vperm.xlu0 %48, %v16
    %v50 = vpop.permute.xlu0 %49
    %v52 = vperm.slane %v17, 2
    %v53 = vmul.f32 %v46, %v52
    %v54 = vmul.f32 %v50, %v52
    %v55 = vadd.f32 %v42, %v53
    %v56 = vadd.f32 %v43, %v54
    %57 = vset.pattern.permute.xlu0 3
    %58 = vperm.xlu0 %57, %v15
    %v59 = vpop.permute.xlu0 %58
    %61 = vset.pattern.permute.xlu0 3
    %62 = vperm.xlu0 %61, %v16
    %v63 = vpop.permute.xlu0 %62
    %v65 = vperm.slane %v17, 3
    %v66 = vmul.f32 %v59, %v65
    %v67 = vmul.f32 %v63, %v65
    %v68 = vadd.f32 %v55, %v66
    %v69 = vadd.f32 %v56, %v67
    %v70 = vld [vmem:[%s2] sm:$0x1]
    %v72 = vperm.slane %v70, 0
    %v74 = vadd.f32 %v68, %v72
    %v75 = vadd.f32 %v69, %v72
    %v76 = vand.u32 2147483647, %v74
    %vm77 = vcmp.le.f32.partialorder %v76, 0.7853982
    %vm78 = vcmp.lt.s32.totalorder %v74, 0
    %v79 = vand.u32 %v74, 2139095040
    %v80 = vshrl.u32 %v79, 23
    %v81 = vsub.s32 %v80, 127
    %v82 = vand.u32 2147483647, %v74
    %v83 = vand.u32 %v82, 8388607
    %v84 = vor.u32 %v83, 8388608
    %v85 = vsub.s32 0, %v84
    %v86 = vadd.s32 %v81, 1
    %vm87 = vcmp.gt.s32.totalorder %v86, 0
    %v88 = vsel %vm87, %v86, 0
    %v89 = vshrl.u32 %v88, 5
    %v90 = vand.u32 %v88, 31
    %v91 = vsub.s32 32, %v90
    %v92 = vshrl.u32 683565275, %v91
    %v93 = vshll.u32 683565275, %v90
    %v94 = vshrl.u32 2475754826, %v91
    %v95 = vor.u32 %v93, %v94
    %v96 = vshll.u32 2475754826, %v90
    %v97 = vshrl.u32 2131351028, %v91
    %v98 = vor.u32 %v96, %v97
    %v99 = vshll.u32 2131351028, %v90
    %v100 = vshrl.u32 2102212464, %v91
    %v101 = vor.u32 %v99, %v100
    %v102 = vshll.u32 2102212464, %v90
    %v103 = vshrl.u32 920167782, %v91
    %v104 = vor.u32 %v102, %v103
    %v105 = vshll.u32 920167782, %v90
    %v106 = vshrl.u32 1326507024, %v91
    %v107 = vor.u32 %v105, %v106
    %vm108 = vcmp.lt.s32.totalorder %v89, 1
    %vm109 = vcmp.lt.s32.totalorder %v89, 2
    %vm110 = vcmp.lt.s32.totalorder %v89, 3
    %vm111 = vcmp.lt.s32.totalorder %v89, 4
    %v112 = vsel %vm108, %v92, %v95
    %v113 = vsel %vm111, %v101, 2102212464
    %v114 = vsel %vm110, %v98, %v113
    %v115 = vsel %vm109, %v112, %v114
    %v116 = vsel %vm108, %v95, %v98
    %v117 = vsel %vm111, %v104, 920167782
    %v118 = vsel %vm110, %v101, %v117
    %v119 = vsel %vm109, %v116, %v118
    %v120 = vsel %vm108, %v98, %v101
    %v121 = vsel %vm111, %v107, 1326507024
    %v122 = vsel %vm110, %v104, %v121
    %v123 = vsel %vm109, %v120, %v122
    %v124 = vshll.u32 %v84, 8
    %v125 = vand.u32 %v124, 65535
    %v126 = vshrl.u32 %v124, 16
    %v127 = vand.u32 %v123, 65535
    %v128 = vshrl.u32 %v123, 16
    %v129 = vmul.u32 %v125, %v127
    %v130 = vmul.u32 %v125, %v128
    %v131 = vmul.u32 %v126, %v127
    %v132 = vmul.u32 %v126, %v128
    %v133 = vshll.u32 %v130, 16
    %v134 = vshrl.u32 %v130, 16
    %v135 = vshll.u32 %v131, 16
    %v136 = vshrl.u32 %v131, 16
    %vm137 = vc.u32 %v129, %v133
    %v138 = vsel %vm137, 1, 0
    %v139 = vadd.s32 %v129, %v133
    %v140 = vadd.s32 %v132, %v138
    %vm141 = vc.u32 %v139, %v135
    %v142 = vsel %vm141, 1, 0
    %v143 = vadd.s32 %v139, %v135
    %v144 = vadd.s32 %v140, %v142
    %v145 = vadd.s32 %v144, %v134
    %v146 = vadd.s32 %v145, %v136
    %v147 = vand.u32 %v124, 65535
    %v148 = vshrl.u32 %v124, 16
    %v149 = vand.u32 %v119, 65535
    %v150 = vshrl.u32 %v119, 16
    %v151 = vmul.u32 %v147, %v149
    %v152 = vmul.u32 %v147, %v150
    %v153 = vmul.u32 %v148, %v149
    %v154 = vmul.u32 %v148, %v150
    %v155 = vshll.u32 %v152, 16
    %v156 = vshrl.u32 %v152, 16
    %v157 = vshll.u32 %v153, 16
    %v158 = vshrl.u32 %v153, 16
    %vm159 = vc.u32 %v151, %v155
    %v160 = vsel %vm159, 1, 0
    %v161 = vadd.s32 %v151, %v155
    %v162 = vadd.s32 %v154, %v160
    %vm163 = vc.u32 %v161, %v157
    %v164 = vsel %vm163, 1, 0
    %v165 = vadd.s32 %v161, %v157
    %v166 = vadd.s32 %v162, %v164
    %v167 = vadd.s32 %v166, %v156
    %v168 = vadd.s32 %v167, %v158
    %v169 = vmul.u32 %v124, %v115
    %v170 = vadd.s32 %v146, %v165
    %vm171 = vc.u32 %v146, %v165
    %v172 = vadd.s32 %v168, 1
    %v173 = vsel %vm171, %v172, %v168
    %v174 = vadd.s32 %v169, %v173
    %v175 = vadd.s32 %v174, 536870912
    %v176 = vshrl.u32 %v175, 30
    %v177 = vshll.u32 %v176, 30
    %v178 = vsub.s32 %v174, %v177
    %vm179 = vcmp.lt.s32.totalorder %v178, 0
    %v180 = vsub.s32 0, %v178
    %v181 = vsel %vm179, %v180, %v178
    %v182 = vclz %v181
    %v183 = vsub.s32 %v182, 2
    %vm184 = vcmp.gt.s32.totalorder 0, %v183
    %v185 = vsel %vm184, 0, %v183
    %v186 = vsub.s32 32, %v185
    %v187 = vshll.u32 %v178, %v185
    %v188 = vshrl.u32 %v170, %v186
    %v189 = vor.u32 %v187, %v188
    %v190 = vsub.s32 4294967266, %v185
    %v191 = vadd.s32 %v190, 127
    %v192 = vshll.u32 %v191, 23
    %v193 = vor.u32 4788187, %v192
    %v194 = vand.u32 2147483647, %v193
    %v196 = vcvt.s32.f32 %v189
    %v197 = vmul.f32 %v196, %v194
    %v198 = vxor.u32 %v197, 2147483648
    %v199 = vsel %vm78, %v198, %v197
    %v200 = vsub.s32 4, %v176
    %v201 = vsel %vm78, %v200, %v176
    %v202 = vsel %vm77, %v74, %v199
    %v203 = vsel %vm77, 0, %v201
    %v204 = vmul.f32 %v202, %v202
    %v205 = vmul.f32 %v204, -0.001358992
    %v206 = vadd.f32 %v205, 0.041655596
    %v207 = vmul.f32 %v204, %v206
    %v208 = vadd.f32 %v207, -0.4999988
    %v209 = vmul.f32 %v204, %v208
    %v210 = vadd.f32 1.0, %v209
    %v211 = vmul.f32 %v202, %v202
    %v212 = vmul.f32 %v211, -0.00019511016
    %v213 = vadd.f32 %v212, 0.008332121
    %v214 = vmul.f32 %v211, %v213
    %v215 = vadd.f32 %v214, -0.16666654
    %v216 = vmul.f32 %v211, %v215
    %v217 = vadd.f32 %v216, 1.0
    %v218 = vmul.f32 %v217, %v202
    %vm219 = vweird.f32 %v74
    %v220 = vadd.s32 %v203, 3
    %v221 = vand.u32 %v220, 3
    %vm222 = vcmp.lt.s32.totalorder %v221, 2
    %vm223 = vcmp.eq.s32.totalorder %v221, 0
    %v224 = vxor.u32 %v218, 2147483648
    %v225 = vsel %vm223, %v210, %v224
    %vm226 = vcmp.eq.s32.totalorder %v221, 2
    %v227 = vxor.u32 %v210, 2147483648
    %v228 = vsel %vm226, %v227, %v218
    %v229 = vsel %vm222, %v225, %v228
    %v230 = vsel %vm219, nan, %v229
    %v231 = vand.u32 2147483647, %v75
    %vm232 = vcmp.le.f32.partialorder %v231, 0.7853982
    %vm233 = vcmp.lt.s32.totalorder %v75, 0
    %v234 = vand.u32 %v75, 2139095040
    %v235 = vshrl.u32 %v234, 23
    %v236 = vsub.s32 %v235, 127
    %v237 = vand.u32 2147483647, %v75
    %v238 = vand.u32 %v237, 8388607
    %v239 = vor.u32 %v238, 8388608
    %v240 = vsub.s32 0, %v239
    %v241 = vadd.s32 %v236, 1
    %vm242 = vcmp.gt.s32.totalorder %v241, 0
    %v243 = vsel %vm242, %v241, 0
    %v244 = vshrl.u32 %v243, 5
    %v245 = vand.u32 %v243, 31
    %v246 = vsub.s32 32, %v245
    %v247 = vshrl.u32 683565275, %v246
    %v248 = vshll.u32 683565275, %v245
    %v249 = vshrl.u32 2475754826, %v246
    %v250 = vor.u32 %v248, %v249
    %v251 = vshll.u32 2475754826, %v245
    %v252 = vshrl.u32 2131351028, %v246
    %v253 = vor.u32 %v251, %v252
    %v254 = vshll.u32 2131351028, %v245
    %v255 = vshrl.u32 2102212464, %v246
    %v256 = vor.u32 %v254, %v255
    %v257 = vshll.u32 2102212464, %v245
    %v258 = vshrl.u32 920167782, %v246
    %v259 = vor.u32 %v257, %v258
    %v260 = vshll.u32 920167782, %v245
    %v261 = vshrl.u32 1326507024, %v246
    %v262 = vor.u32 %v260, %v261
    %vm263 = vcmp.lt.s32.totalorder %v244, 1
    %vm264 = vcmp.lt.s32.totalorder %v244, 2
    %vm265 = vcmp.lt.s32.totalorder %v244, 3
    %vm266 = vcmp.lt.s32.totalorder %v244, 4
    %v267 = vsel %vm263, %v247, %v250
    %v268 = vsel %vm266, %v256, 2102212464
    %v269 = vsel %vm265, %v253, %v268
    %v270 = vsel %vm264, %v267, %v269
    %v271 = vsel %vm263, %v250, %v253
    %v272 = vsel %vm266, %v259, 920167782
    %v273 = vsel %vm265, %v256, %v272
    %v274 = vsel %vm264, %v271, %v273
    %v275 = vsel %vm263, %v253, %v256
    %v276 = vsel %vm266, %v262, 1326507024
    %v277 = vsel %vm265, %v259, %v276
    %v278 = vsel %vm264, %v275, %v277
    %v279 = vshll.u32 %v239, 8
    %v280 = vand.u32 %v279, 65535
    %v281 = vshrl.u32 %v279, 16
    %v282 = vand.u32 %v278, 65535
    %v283 = vshrl.u32 %v278, 16
    %v284 = vmul.u32 %v280, %v282
    %v285 = vmul.u32 %v280, %v283
    %v286 = vmul.u32 %v281, %v282
    %v287 = vmul.u32 %v281, %v283
    %v288 = vshll.u32 %v285, 16
    %v289 = vshrl.u32 %v285, 16
    %v290 = vshll.u32 %v286, 16
    %v291 = vshrl.u32 %v286, 16
    %vm292 = vc.u32 %v284, %v288
    %v293 = vsel %vm292, 1, 0
    %v294 = vadd.s32 %v284, %v288
    %v295 = vadd.s32 %v287, %v293
    %vm296 = vc.u32 %v294, %v290
    %v297 = vsel %vm296, 1, 0
    %v298 = vadd.s32 %v294, %v290
    %v299 = vadd.s32 %v295, %v297
    %v300 = vadd.s32 %v299, %v289
    %v301 = vadd.s32 %v300, %v291
    %v302 = vand.u32 %v279, 65535
    %v303 = vshrl.u32 %v279, 16
    %v304 = vand.u32 %v274, 65535
    %v305 = vshrl.u32 %v274, 16
    %v306 = vmul.u32 %v302, %v304
    %v307 = vmul.u32 %v302, %v305
    %v308 = vmul.u32 %v303, %v304
    %v309 = vmul.u32 %v303, %v305
    %v310 = vshll.u32 %v307, 16
    %v311 = vshrl.u32 %v307, 16
    %v312 = vshll.u32 %v308, 16
    %v313 = vshrl.u32 %v308, 16
    %vm314 = vc.u32 %v306, %v310
    %v315 = vsel %vm314, 1, 0
    %v316 = vadd.s32 %v306, %v310
    %v317 = vadd.s32 %v309, %v315
    %vm318 = vc.u32 %v316, %v312
    %v319 = vsel %vm318, 1, 0
    %v320 = vadd.s32 %v316, %v312
    %v321 = vadd.s32 %v317, %v319
    %v322 = vadd.s32 %v321, %v311
    %v323 = vadd.s32 %v322, %v313
    %v324 = vmul.u32 %v279, %v270
    %v325 = vadd.s32 %v301, %v320
    %vm326 = vc.u32 %v301, %v320
    %v327 = vadd.s32 %v323, 1
    %v328 = vsel %vm326, %v327, %v323
    %v329 = vadd.s32 %v324, %v328
    %v330 = vadd.s32 %v329, 536870912
    %v331 = vshrl.u32 %v330, 30
    %v332 = vshll.u32 %v331, 30
    %v333 = vsub.s32 %v329, %v332
    %vm334 = vcmp.lt.s32.totalorder %v333, 0
    %v335 = vsub.s32 0, %v333
    %v336 = vsel %vm334, %v335, %v333
    %v337 = vclz %v336
    %v338 = vsub.s32 %v337, 2
    %vm339 = vcmp.gt.s32.totalorder 0, %v338
    %v340 = vsel %vm339, 0, %v338
    %v341 = vsub.s32 32, %v340
    %v342 = vshll.u32 %v333, %v340
    %v343 = vshrl.u32 %v325, %v341
    %v344 = vor.u32 %v342, %v343
    %v345 = vsub.s32 4294967266, %v340
    %v346 = vadd.s32 %v345, 127
    %v347 = vshll.u32 %v346, 23
    %v348 = vor.u32 4788187, %v347
    %v349 = vand.u32 2147483647, %v348
    %v351 = vcvt.s32.f32 %v344
    %v352 = vmul.f32 %v351, %v349
    %v353 = vxor.u32 %v352, 2147483648
    %v354 = vsel %vm233, %v353, %v352
    %v355 = vsub.s32 4, %v331
    %v356 = vsel %vm233, %v355, %v331
    %v357 = vsel %vm232, %v75, %v354
    %v358 = vsel %vm232, 0, %v356
    %v359 = vmul.f32 %v357, %v357
    %v360 = vmul.f32 %v359, -0.001358992
    %v361 = vadd.f32 %v360, 0.041655596
    %v362 = vmul.f32 %v359, %v361
    %v363 = vadd.f32 %v362, -0.4999988
    %v364 = vmul.f32 %v359, %v363
    %v365 = vadd.f32 1.0, %v364
    %v366 = vmul.f32 %v357, %v357
    %v367 = vmul.f32 %v366, -0.00019511016
    %v368 = vadd.f32 %v367, 0.008332121
    %v369 = vmul.f32 %v366, %v368
    %v370 = vadd.f32 %v369, -0.16666654
    %v371 = vmul.f32 %v366, %v370
    %v372 = vadd.f32 %v371, 1.0
    %v373 = vmul.f32 %v372, %v357
    %vm374 = vweird.f32 %v75
    %v375 = vadd.s32 %v358, 3
    %v376 = vand.u32 %v375, 3
    %vm377 = vcmp.lt.s32.totalorder %v376, 2
    %vm378 = vcmp.eq.s32.totalorder %v376, 0
    %v379 = vxor.u32 %v373, 2147483648
    %v380 = vsel %vm378, %v365, %v379
    %vm381 = vcmp.eq.s32.totalorder %v376, 2
    %v382 = vxor.u32 %v365, 2147483648
    %v383 = vsel %vm381, %v382, %v373
    %v384 = vsel %vm377, %v380, %v383
    %v385 = vsel %vm374, nan, %v384
    %v386 = vlaneseq
    %v387 = vand.u32 %v386, 127
    %vm388 = vcmp.lt.s32.totalorder %v387, 4
    %v389 = vsel %vm388, 1, 0
    %vm390 = vcmp.eq.s32.totalorder %v389, 1
    %v391 = vsel %vm390, %v74, %v230
    %v392 = vsel %vm390, %v75, %v385
    %vm393 = vcmask 293888
    %394 = vst.msk [vmem:[#allocation2] sm:$0xff] %vm393, %v391
    %395 = vst.msk [vmem:[#allocation2 + $0x8] sm:$0xff] %vm393, %v392
    // Predicated region
    $region14: #{tpu_custom_call.1} parent=1 // pred_check
      _
    $region15: #{tpu_custom_call.1} parent=1 // pred_check_branch
      %397 = sbr.rel (0) target = $region17
    $region16: #{tpu_custom_call.1} parent=1 // pred_region
      %399 = vsyncadd [#allocation3], 0
      %s400 = sshll.u32 [#allocation2], 4
      %s401 = int_to_ptr.vmem [resolvable:$true] %s400
      %s402 = sshll.u32 %s3, 4
      %s403 = int_to_ptr.hbm [resolvable:$true] %s402
      %408 = dma.vmem_to_hbm [thread:$0]  %s401, 256, %s403, [#allocation3], 128, 128, 8
    $region17: #{tpu_custom_call.1} parent=1 // pred_fallthru
      _
    // Predicated region
    $region18: #{tpu_custom_call.1} parent=1 // pred_check
      _
    $region19: #{tpu_custom_call.1} parent=1 // pred_check_branch
      %410 = sbr.rel (0) target = $region21
    $region20: #{tpu_custom_call.1} parent=1 // pred_region
      %412 = dma.done [#allocation3], 256
    $region21: #{tpu_custom_call.1} parent=1 // pred_fallthru
      _
    %413 = vsyncpa [#allocation3], 1

</llo_original>
